<compile_context>
chip_gen: v7x
topology: tpu7x:2x2x1
jax: 0.10.0
libtpu: 0.0.40
codegen_flags: <defaults>
</compile_context>

<pallas_src>
import jax
import jax.numpy as jnp
from jax.experimental import pallas as pl
from jax.experimental.pallas import tpu as pltpu


def _classifier_kernel(x_ref, w_ref, b_ref, o_ref, acc_ref):
    # x_ref: (TB, TD) VMEM   w_ref: (1, TD) VMEM   b_ref: (1,) SMEM
    # o_ref: (1, TB) VMEM    acc_ref: (1, TB) f32 VMEM scratch
    k = pl.program_id(1)

    @pl.when(k == 0)
    def _():
        acc_ref[...] = jnp.zeros_like(acc_ref)

    # partial_logits[0, t] = sum_d w[0, d] * x[t, d]  -> lane-dense (1, TB) row.
    acc_ref[...] += jax.lax.dot_general(
        w_ref[...],
        x_ref[...],
        dimension_numbers=(((1,), (1,)), ((), ())),
        preferred_element_type=jnp.float32,
    )

    @pl.when(k == pl.num_programs(1) - 1)
    def _():
        o_ref[...] = jax.nn.sigmoid(acc_ref[...] + b_ref[0]).astype(o_ref.dtype)


def _round_up(x, m):
    return ((x + m - 1) // m) * m


def _choose_tiles(B, D, max_tile_bytes):
    """Pick (block_b, block_d) so a single x tile fits the VMEM budget."""
    bpe = 4  # float32
    b_pad = _round_up(B, 128)
    if 128 * D * bpe <= max_tile_bytes:
        # Whole reduction dim fits in one tile: no D padding, single K step.
        block_d = D
        cap = max(128, (max_tile_bytes // (D * bpe)) // 128 * 128)
        block_b = min(cap, b_pad)
        # Keep >= 2 batch tiles when the batch allows (feed both v7x TCs).
        if b_pad > 128 and b_pad // block_b < 2:
            block_b = max(128, (b_pad // 2) // 128 * 128)
    else:
        # Very large input_dim: tile the reduction axis as well.
        block_b = 128 if b_pad == 128 else 256
        block_d = max(128, (max_tile_bytes // (block_b * bpe)) // 128 * 128)
        block_d = min(block_d, _round_up(D, 128))
    return block_b, block_d


def activation_classifier(x, w, b, *, block_b=None, block_d=None,
                          max_tile_bytes=8 << 20):
    """x: [B, D] f32, w: [1, D] f32 (torch Linear layout), b: [1] f32 -> [B, 1] f32."""
    B, D = x.shape
    assert w.shape == (1, D) and b.shape == (1,)

    auto_bb, auto_bd = _choose_tiles(B, D, max_tile_bytes)
    if block_b is None:
        block_b = auto_bb
    if block_d is None:
        block_d = auto_bd
    block_b = _round_up(block_b, 128)  # lane-dense output blocks

    num_b = pl.cdiv(B, block_b)
    num_d = pl.cdiv(D, block_d)
    b_padded = num_b * block_b
    d_padded = num_d * block_d

    # Zero-pad to whole tiles; zero rows/cols contribute nothing to the dot and
    # padded batch rows are sliced off below.
    if b_padded != B or d_padded != D:
        x = jnp.pad(x, ((0, b_padded - B), (0, d_padded - D)))
    if d_padded != D:
        w = jnp.pad(w, ((0, 0), (0, d_padded - D)))

    out = pl.pallas_call(
        _classifier_kernel,
        out_shape=jax.ShapeDtypeStruct((1, b_padded), jnp.float32),
        grid_spec=pltpu.PrefetchScalarGridSpec(
            num_scalar_prefetch=0,
            grid=(num_b, num_d),  # reduction axis last
            in_specs=[
                pl.BlockSpec((block_b, block_d), lambda i, k: (i, k)),   # x tile
                pl.BlockSpec((1, block_d), lambda i, k: (0, k)),         # weight slice
                pl.BlockSpec(memory_space=pltpu.MemorySpace.SMEM),       # bias scalar
            ],
            out_specs=pl.BlockSpec((1, block_b), lambda i, k: (0, i)),   # lane-dense row
            scratch_shapes=[pltpu.VMEM((1, block_b), jnp.float32)],      # f32 accumulator
        ),
        compiler_params=pltpu.CompilerParams(
            dimension_semantics=("parallel", "arbitrary"),
            vmem_limit_bytes=32 * 1024 * 1024,
        ),
    )(x, w, b)

    return out[0, :B].reshape(B, 1)


if __name__ == "__main__":
    key = jax.random.PRNGKey(0)
    kx, kw, kb = jax.random.split(key, 3)

    B, D = 16, 32  # small demo shapes: batch=16, input_dim=32

    x = jax.random.normal(kx, (B, D), dtype=jnp.float32)
    # Parameters in PyTorch nn.Linear(D, 1) layout: weight [1, D], bias [1].
    w = jax.random.normal(kw, (1, D), dtype=jnp.float32) * 0.1
    b = jax.random.normal(kb, (1,), dtype=jnp.float32) * 0.1

    out = activation_classifier(x, w, b)
    out = jax.block_until_ready(out)

    # Reference: torch.sigmoid(nn.Linear(D, 1)(x)) == sigmoid(x @ W^T + b).
    ref = jax.nn.sigmoid(x @ w.T + b)
    assert out.shape == (B, 1)
    assert jnp.allclose(out, ref, atol=1e-5, rtol=1e-5)

    print("KERNEL_OK")
</pallas_src>

<mosaic_0001>
module attributes {stable_mosaic.version = 11 : i64} {
  func.func @_classifier_kernel(%arg0: i32, %arg1: i32, %arg2: memref<128x32xf32, #tpu.memory_space<vmem>>, %arg3: memref<1x32xf32, #tpu.memory_space<vmem>>, %arg4: memref<1xf32, #tpu.memory_space<smem>>, %arg5: memref<1x128xf32, #tpu.memory_space<vmem>>, %arg6: memref<1x128xf32, #tpu.memory_space<vmem>>) attributes {dimension_semantics = [#tpu.dimension_semantics<parallel>, #tpu.dimension_semantics<arbitrary>], iteration_bounds = array<i64: 1, 1>, scalar_prefetch = 0 : i64, scratch_operands = 1 : i64, tpu.core_type = #tpu.core_type<tc>, window_params = [{transform_indices = @transform_0, window_bounds = array<i64: 128, 32>}, {transform_indices = @transform_1, window_bounds = array<i64: 1, 32>}, {transform_indices = @transform_2, window_bounds = array<i64: 1>}, {transform_indices = @transform_3, window_bounds = array<i64: 1, 128>}]} {
    %c0_i32 = arith.constant 0 : i32
    %0 = arith.cmpi eq, %arg1, %c0_i32 : i32
    %1 = arith.extui %0 : i1 to i32
    %c0_i32_0 = arith.constant 0 : i32
    %2 = arith.cmpi ne, %1, %c0_i32_0 : i32
    scf.if %2 {
      %cst_10 = arith.constant 0.000000e+00 : f32
      %12 = vector.broadcast %cst_10 : f32 to vector<1x128xf32>
      %c0_11 = arith.constant 0 : index
      %c0_12 = arith.constant 0 : index
      %13 = vector.load %arg6[%c0_11, %c0_12] : memref<1x128xf32, #tpu.memory_space<vmem>>, vector<1x128xf32>
      tpu.vector_store %arg6[%c0_11, %c0_12], %12 {strides = array<i32>} : memref<1x128xf32, #tpu.memory_space<vmem>>, vector<1x128xf32>,
    } else {
    }
    %c0 = arith.constant 0 : index
    %c0_1 = arith.constant 0 : index
    %3 = vector.load %arg6[%c0, %c0_1] : memref<1x128xf32, #tpu.memory_space<vmem>>, vector<1x128xf32>
    %c0_2 = arith.constant 0 : index
    %c0_3 = arith.constant 0 : index
    %4 = vector.load %arg3[%c0_2, %c0_3] : memref<1x32xf32, #tpu.memory_space<vmem>>, vector<1x32xf32>
    %c0_4 = arith.constant 0 : index
    %c0_5 = arith.constant 0 : index
    %5 = vector.load %arg2[%c0_4, %c0_5] : memref<128x32xf32, #tpu.memory_space<vmem>>, vector<128x32xf32>
    %cst = arith.constant dense<0.000000e+00> : vector<1x128xf32>
    %6 = tpu.matmul %4, %5, %cst {dimension_numbers = #tpu.dot_dimension_numbers<[1], [1], [0], [0], [0, 0, 1, 0], [], []>} : vector<1x32xf32>, vector<128x32xf32>, vector<1x128xf32> -> vector<1x128xf32>
    %7 = arith.addf %3, %6 : vector<1x128xf32>
    %c0_6 = arith.constant 0 : index
    %c0_7 = arith.constant 0 : index
    %8 = vector.load %arg6[%c0_6, %c0_7] : memref<1x128xf32, #tpu.memory_space<vmem>>, vector<1x128xf32>
    tpu.vector_store %arg6[%c0_6, %c0_7], %7 {strides = array<i32>} : memref<1x128xf32, #tpu.memory_space<vmem>>, vector<1x128xf32>,
    %c0_i32_8 = arith.constant 0 : i32
    %9 = arith.cmpi eq, %arg1, %c0_i32_8 : i32
    %10 = arith.extui %9 : i1 to i32
    %c0_i32_9 = arith.constant 0 : i32
    %11 = arith.cmpi ne, %10, %c0_i32_9 : i32
    scf.if %11 {
      %c0_10 = arith.constant 0 : index
      %c0_11 = arith.constant 0 : index
      %12 = vector.load %arg6[%c0_10, %c0_11] : memref<1x128xf32, #tpu.memory_space<vmem>>, vector<1x128xf32>
      %c0_12 = arith.constant 0 : index
      %13 = memref.load %arg4[%c0_12] : memref<1xf32, #tpu.memory_space<smem>>
      %14 = vector.broadcast %13 : f32 to vector<1x128xf32>
      %15 = arith.addf %12, %14 : vector<1x128xf32>
      %16 = arith.negf %15 : vector<1x128xf32>
      %17 = math.exp %16 : vector<1x128xf32>
      %cst_13 = arith.constant 1.000000e+00 : f32
      %18 = vector.broadcast %cst_13 : f32 to vector<1x128xf32>
      %19 = arith.addf %18, %17 : vector<1x128xf32>
      %20 = arith.divf %18, %19 : vector<1x128xf32>
      %c0_14 = arith.constant 0 : index
      %c0_15 = arith.constant 0 : index
      %21 = vector.load %arg5[%c0_14, %c0_15] : memref<1x128xf32, #tpu.memory_space<vmem>>, vector<1x128xf32>
      tpu.vector_store %arg5[%c0_14, %c0_15], %20 {strides = array<i32>} : memref<1x128xf32, #tpu.memory_space<vmem>>, vector<1x128xf32>,
    } else {
    }
    return
  }
  func.func @transform_0(%arg0: i32, %arg1: i32) -> (i32, i32) {
    %c0_i32 = arith.constant 0 : i32
    return %arg0, %arg1 : i32, i32
  }
  func.func @transform_1(%arg0: i32, %arg1: i32) -> (i32, i32) {
    %c0_i32 = arith.constant 0 : i32
    %c0_i32_0 = arith.constant 0 : i32
    return %c0_i32, %arg1 : i32, i32
  }
  func.func @transform_2(%arg0: i32, %arg1: i32) -> i32 {
    %c0_i32 = arith.constant 0 : i32
    %c0_i32_0 = arith.constant 0 : i32
    return %c0_i32 : i32
  }
  func.func @transform_3(%arg0: i32, %arg1: i32) -> (i32, i32) {
    %c0_i32 = arith.constant 0 : i32
    %c0_i32_0 = arith.constant 0 : i32
    return %c0_i32, %arg0 : i32, i32
  }
}

</mosaic_0001>

<llo_original>
// kernel: tpu_custom_call.1
$region0: #{tpu_custom_call.1}
  #allocation0 [shape = 'u32[]', space=smem, size = 0x4, offset = 0x4, fixed_abs, tag = 'smem constant byte address 0x4 - core index']
  #allocation1 [shape = 'u32[144,128]{1,0:T(1,128)}', space=vmem, size = 0x12000, scoped, tag = 'internal scratch']
  #allocation2 [shape = 'f32[1,128]{1,0:T(1,128)}', space=vmem, size = 0x200, scoped, tag = 'scratch operand']
  #allocation3 [shape = 'f32[1]{0:T(128)S(6)}', space=smem, size = 0x200, scoped, tag = 'scoped memory for tpu_custom_call.1']
  %s0 = inlined_call_operand.vmem [shape: f32[128,32], index: 0, kind: input, shape index: {}]
  %s1 = inlined_call_operand.vmem [shape: f32[1,32], index: 1, kind: input, shape index: {}]
  %s2 = inlined_call_operand.<no memory space> [shape: f32[1], index: 2, kind: input, shape index: {}]
  %s3 = inlined_call_operand.hbm [shape: f32[1,128], index: 3, kind: output, shape index: {}]
  %s4 = sld [smem:[#allocation0]]
  $region30: #{tpu_custom_call.1} parent=0
    _
  %s6 = ssub.s32 1, %s4
  %s7 = scalar_select 0, %s6, %s4
  %8 = sst [smem:[#allocation3]] %s2
  $region1: #{tpu_custom_call.1} parent=0
    #allocation4 [shape = 'u8[512]{0}', space=vmem, size = 0x400, scoped, tag = 'output window, operand 0, single buffered']
    #allocation5 [shape = 's32[1]{0}', space=sflag, size = 0x4, scoped, tag = 'scoped memory for tpu_custom_call.1']
    %9 = vsyncpa [#allocation5], 0
    // Predicated region
    $region2: #{tpu_custom_call.1} parent=1 // pred_check
      _
    $region3: #{tpu_custom_call.1} parent=1 // pred_check_branch
      %11 = sbr.rel (0) target = $region5
    $region4: #{tpu_custom_call.1} parent=1 // pred_region
      _
    $region5: #{tpu_custom_call.1} parent=1 // pred_fallthru
      _
    // Predicated region
    $region6: #{tpu_custom_call.1} parent=1 // pred_check
      _
    $region7: #{tpu_custom_call.1} parent=1 // pred_check_branch
      %13 = sbr.rel (0) target = $region9
    $region8: #{tpu_custom_call.1} parent=1 // pred_region
      _
    $region9: #{tpu_custom_call.1} parent=1 // pred_fallthru
      _
    // Predicated region
    $region10: #{tpu_custom_call.1} parent=1 // pred_check
      _
    $region11: #{tpu_custom_call.1} parent=1 // pred_check_branch
      %15 = sbr.rel (0) target = $region13
    $region12: #{tpu_custom_call.1} parent=1 // pred_region
      _
    $region13: #{tpu_custom_call.1} parent=1 // pred_fallthru
      _
    %p16 = scmp.eq.s32.totalorder 0, 0
    // Predicated region
    $region14: #{tpu_custom_call.1} parent=1 // pred_check
      %p17 = pneg %p16
    $region15: #{tpu_custom_call.1} parent=1 // pred_check_branch
      %19 = sbr.rel (%p17) target = $region17
    $region16: #{tpu_custom_call.1} parent=1 // pred_region
      %20 = vst [vmem:[#allocation2] sm:$0x1] 0.0
    $region17: #{tpu_custom_call.1} parent=1 // pred_fallthru
      _
    %v21 = vld [vmem:[#allocation2] sm:$0x1]
    %v22 = vld [vmem:[%s1] sm:$0x1]
    %v23 = vld [vmem:[%s0] sm:$0xff]
    %v24 = vld [vmem:[%s0 + $0x8] sm:$0xff]
    %v25 = vld [vmem:[%s0 + $0x10] sm:$0xff]
    %v26 = vld [vmem:[%s0 + $0x18] sm:$0xff]
    %v27 = vld [vmem:[%s0 + $0x20] sm:$0xff]
    %v28 = vld [vmem:[%s0 + $0x28] sm:$0xff]
    %v29 = vld [vmem:[%s0 + $0x30] sm:$0xff]
    %v30 = vld [vmem:[%s0 + $0x38] sm:$0xff]
    %v31 = vld [vmem:[%s0 + $0x40] sm:$0xff]
    %v32 = vld [vmem:[%s0 + $0x48] sm:$0xff]
    %v33 = vld [vmem:[%s0 + $0x50] sm:$0xff]
    %v34 = vld [vmem:[%s0 + $0x58] sm:$0xff]
    %v35 = vld [vmem:[%s0 + $0x60] sm:$0xff]
    %v36 = vld [vmem:[%s0 + $0x68] sm:$0xff]
    %v37 = vld [vmem:[%s0 + $0x70] sm:$0xff]
    %v38 = vld [vmem:[%s0 + $0x78] sm:$0xff]
    %vm39 = vcmask 261120
    %v41 = vsel %vm39, %v22, 0
    %v44 = vsel %vm39, %v23, 0
    %v47 = vsel %vm39, %v24, 0
    %v50 = vsel %vm39, %v25, 0
    %v53 = vsel %vm39, %v26, 0
    %v56 = vsel %vm39, %v27, 0
    %v59 = vsel %vm39, %v28, 0
    %v62 = vsel %vm39, %v29, 0
    %v65 = vsel %vm39, %v30, 0
    %v68 = vsel %vm39, %v31, 0
    %v71 = vsel %vm39, %v32, 0
    %v74 = vsel %vm39, %v33, 0
    %v77 = vsel %vm39, %v34, 0
    %v80 = vsel %vm39, %v35, 0
    %v83 = vsel %vm39, %v36, 0
    %v86 = vsel %vm39, %v37, 0
    %v89 = vsel %vm39, %v38, 0
    %91 = vmatprep.subr.mxu0 0.0
    %92 = vmatpush1.xpose.msra.mxu0 %v44
    %93 = vmatprep.subr.mxu0 0.0
    %94 = vmatpush1.xpose.msra.mxu0 %v47
    %95 = vmatprep.subr.mxu0 0.0
    %96 = vmatpush1.xpose.msra.mxu0 %v50
    %97 = vmatprep.subr.mxu0 0.0
    %98 = vmatpush1.xpose.msra.mxu0 %v53
    %99 = vmatprep.subr.mxu0 0.0
    %100 = vmatpush1.xpose.msra.mxu0 %v56
    %101 = vmatprep.subr.mxu0 0.0
    %102 = vmatpush1.xpose.msra.mxu0 %v59
    %103 = vmatprep.subr.mxu0 0.0
    %104 = vmatpush1.xpose.msra.mxu0 %v62
    %105 = vmatprep.subr.mxu0 0.0
    %106 = vmatpush1.xpose.msra.mxu0 %v65
    %107 = vmatprep.subr.mxu0 0.0
    %108 = vmatpush1.xpose.msra.mxu0 %v68
    %109 = vmatprep.subr.mxu0 0.0
    %110 = vmatpush1.xpose.msra.mxu0 %v71
    %111 = vmatprep.subr.mxu0 0.0
    %112 = vmatpush1.xpose.msra.mxu0 %v74
    %113 = vmatprep.subr.mxu0 0.0
    %114 = vmatpush1.xpose.msra.mxu0 %v77
    %115 = vmatprep.subr.mxu0 0.0
    %116 = vmatpush1.xpose.msra.mxu0 %v80
    %117 = vmatprep.subr.mxu0 0.0
    %118 = vmatpush1.xpose.msra.mxu0 %v83
    %119 = vmatprep.subr.mxu0 0.0
    %120 = vmatpush1.xpose.msra.mxu0 %v86
    %121 = vmatprep.subr.mxu0 0.0
    %122 = vmatpush1.xpose.msra.mxu0 %v89
    %123 = vmatprep.subr.mxu0 0.0
    %124 = vmatpush1.xpose.msra.mxu0 0.0
    %125 = vmatprep.subr.mxu0 0.0
    %126 = vmatpush1.xpose.msra.mxu0 0.0
    %127 = vmatprep.subr.mxu0 0.0
    %128 = vmatpush1.xpose.msra.mxu0 0.0
    %129 = vmatprep.subr.mxu0 0.0
    %130 = vmatpush1.xpose.msra.mxu0 0.0
    %131 = vmatprep.subr.mxu0 0.0
    %132 = vmatpush1.xpose.msra.mxu0 0.0
    %133 = vmatprep.subr.mxu0 0.0
    %134 = vmatpush1.xpose.msra.mxu0 0.0
    %135 = vmatprep.subr.mxu0 0.0
    %136 = vmatpush1.xpose.msra.mxu0 0.0
    %137 = vmatprep.subr.mxu0 0.0
    %138 = vmatpush1.xpose.msra.mxu0 0.0
    %139 = vmatprep.subr.mxu0 0.0
    %140 = vmatpush1.xpose.msra.mxu0 0.0
    %141 = vmatprep.subr.mxu0 0.0
    %142 = vmatpush1.xpose.msra.mxu0 0.0
    %143 = vmatprep.subr.mxu0 0.0
    %144 = vmatpush1.xpose.msra.mxu0 0.0
    %145 = vmatprep.subr.mxu0 0.0
    %146 = vmatpush1.xpose.msra.mxu0 0.0
    %147 = vmatprep.subr.mxu0 0.0
    %148 = vmatpush1.xpose.msra.mxu0 0.0
    %149 = vmatprep.subr.mxu0 0.0
    %150 = vmatpush1.xpose.msra.mxu0 0.0
    %151 = vmatprep.subr.mxu0 0.0
    %152 = vmatpush1.xpose.msra.mxu0 0.0
    %153 = vmatprep.subr.mxu0 0.0
    %154 = vmatpush1.xpose.msra.mxu0 0.0
    %155 = vmatprep.mubr.f32.mxu0 0.0
    %156 = vmatmul.mubr.f32.gmra.mrb[0].mxu0 %v41
    %v157 = vpop.f32.mrb[0].mxu0
    %v158 = vadd.f32 0.0, %v157
    %v159 = vpop.f32.mrb[0].mxu0
    %160 = vdwg.mxu0
    %v161 = vadd.f32 %v21, %v158
    %162 = vst [vmem:[#allocation2] sm:$0x1] %v161
    // Predicated region
    $region18: #{tpu_custom_call.1} parent=1 // pred_check
      %p163 = pneg %p16
    $region19: #{tpu_custom_call.1} parent=1 // pred_check_branch
      %165 = sbr.rel (%p163) target = $region21
    $region20: #{tpu_custom_call.1} parent=1 // pred_region
      %v166 = vld [vmem:[#allocation2] sm:$0x1]
      %s167 = sld [smem:[#allocation3]]
      %v168 = vstv %s167
      %v169 = vadd.f32 %v166, %v168
      %v170 = vxor.u32 %v169, 2147483648
      %v171 = vmul.f32 %v170, 1.442695
      %v172 = vpow.pop %v171
      %v173 = vadd.f32 %v172, 1.0
      %v174 = vrcp.pop %v173
      %v175 = vmul.f32 1.0, %v174
      %176 = vst [vmem:[#allocation4] sm:$0x1] %v175
    $region21: #{tpu_custom_call.1} parent=1 // pred_fallthru
      _
    // Predicated region
    $region22: #{tpu_custom_call.1} parent=1 // pred_check
      _
    $region23: #{tpu_custom_call.1} parent=1 // pred_check_branch
      %178 = sbr.rel (0) target = $region25
    $region24: #{tpu_custom_call.1} parent=1 // pred_region
      %s180 = ssub.s32 16, 16
      %181 = vsyncadd [#allocation5], %s180
      %s183 = sshll.u32 [#allocation4], 4
      %s184 = int_to_ptr.vmem [resolvable:$true] %s183
      %186 = dma.vmem_to_hbm [thread:$0]  %s184, 16, %s3, [#allocation5]
    $region25: #{tpu_custom_call.1} parent=1 // pred_fallthru
      _
    // Predicated region
    $region26: #{tpu_custom_call.1} parent=1 // pred_check
      _
    $region27: #{tpu_custom_call.1} parent=1 // pred_check_branch
      %188 = sbr.rel (0) target = $region29
    $region28: #{tpu_custom_call.1} parent=1 // pred_region
      %189 = dma.done [#allocation5], 16
    $region29: #{tpu_custom_call.1} parent=1 // pred_fallthru
      _
    %190 = vsyncpa [#allocation5], 1

</llo_original>
